<compile_context>
chip_gen: v6e
topology: v6e:2x2x1
jax: 0.10.0
libtpu: 0.0.40
codegen_flags: <defaults>
</compile_context>

<pallas_src>
import functools

import jax
import jax.numpy as jnp
import numpy as np
from jax.experimental import pallas as pl
from jax.experimental.pallas import tpu as pltpu


def _round_up(x, m):
    return (x + m - 1) // m * m


# ---------------------------------------------------------------------------
# Generation detection (tiling / dtype policy only; everything works anywhere)
# ---------------------------------------------------------------------------
@functools.lru_cache(maxsize=1)
def _tpu_kind():
    try:
        d = jax.devices()[0]
        if d.platform != "tpu":
            return ""
        return d.device_kind.lower()
    except Exception:
        return ""


def _num_tensorcores():
    # v7x exposes 2 TensorCores per chip; v5e/v6e have 1.
    return 2 if "7" in _tpu_kind() else 1


def _default_weight_dtype():
    # bf16 matmul operands are MXU-native on v6e/v7x (f32 costs extra passes);
    # keep f32 on v5e / unknown hardware.  Accumulation and the bias/ReLU/tanh
    # epilogue are always f32, so this only changes matmul operands.
    k = _tpu_kind()
    if ("v6" in k) or ("7" in k):
        return jnp.bfloat16
    return jnp.float32


_ROW_TILE_ALIGN = 16          # sublane-safe for both f32 and bf16 activations
_ROW_TILE_CAP = 1024          # per-tile VMEM at 1024 rows ~ 1.3 MiB << any VMEM


def _choose_row_tile(n_rows, num_cores):
    """Pick the row tile TB (grid = ceil(N / TB)).

    1-TC chips (v5e/v6e): as few, as large tiles as possible (grid=1 up to
    1024 rows) -- the kernel is fixed-overhead bound per grid step.
    2-TC chips (v7x): guarantee >= 2 balanced tiles once there is enough work
    so dimension_semantics=("parallel",) keeps both TensorCores busy.
    """
    n = _round_up(max(n_rows, 1), _ROW_TILE_ALIGN)
    split_for_cores = num_cores >= 2 and n >= 256
    if n <= _ROW_TILE_CAP and not split_for_cores:
        return n
    min_tiles = 2 if split_for_cores else 1
    n_tiles = max(min_tiles, -(-n // _ROW_TILE_CAP))
    return _round_up(-(-n // n_tiles), _ROW_TILE_ALIGN)


# ---------------------------------------------------------------------------
# Kernels
# ---------------------------------------------------------------------------
def _mlp_tile(z_ref, w_ref, b_ref, *, H, NC, L, w_offs):
    """Shared fused-MLP body: Linear->ReLU, L x (Linear->ReLU), Linear, tanh.

    Weight blocks are stored full-lane (NC = round_up(max(F, IC*H), 128)), so
    every load is an unmasked (rows, NC) tile; activations are carried NC
    lanes wide and the padded lanes stay exactly zero (padded weight columns
    and padded bias lanes are zero).  Matmul operands use w_ref.dtype (f32 or
    bf16); accumulation and the bias/ReLU/tanh epilogue are always f32.
    """
    wdt = w_ref.dtype
    biases = b_ref[...]                                          # (Rb, NC) f32
    h = jnp.dot(z_ref[...], w_ref[pl.ds(w_offs[0], H), :],
                preferred_element_type=jnp.float32)              # (TB, NC)
    h = jnp.maximum(h + biases[0:1, :], 0.0)
    for i in range(L):                                           # static unroll
        h = jnp.dot(h.astype(wdt), w_ref[pl.ds(w_offs[1 + i], NC), :],
                    preferred_element_type=jnp.float32)
        h = jnp.maximum(h + biases[1 + i:2 + i, :], 0.0)
    y = jnp.dot(h.astype(wdt), w_ref[pl.ds(w_offs[1 + L], NC), :],
                preferred_element_type=jnp.float32)
    return jnp.tanh(y + biases[L + 1:L + 2, :])                  # (TB, NC) f32


def cde_func_kernel(z_ref, w_ref, b_ref, out_ref, *, H, OUT, NC, L, w_offs):
    y = _mlp_tile(z_ref, w_ref, b_ref, H=H, NC=NC, L=L, w_offs=w_offs)
    out_ref[...] = y if OUT == NC else y[:, :OUT]


def cde_func_fused_kernel(z_ref, dx_ref, w_ref, b_ref, e_ref, r_ref, out_ref,
                          *, H, NC, L, w_offs):
    y = _mlp_tile(z_ref, w_ref, b_ref, H=H, NC=NC, L=L, w_offs=w_offs)
    # Broadcast dX/dt across the IC-interleaved output lanes and segment-
    # reduce groups of IC lanes back to H outputs using two tiny 0/1 MXU
    # matmuls (avoids an in-kernel lane reshape/relayout).
    dx_b = jnp.dot(dx_ref[...], e_ref[...], preferred_element_type=jnp.float32)
    out_ref[...] = jnp.dot(y * dx_b, r_ref[...],
                           preferred_element_type=jnp.float32)


# ---------------------------------------------------------------------------
# Parameter packing (done once, outside the solver loop)
# ---------------------------------------------------------------------------
def pack_params(params, *, input_channels, hidden_channels,
                hidden_channels_func, hidden_layers_func, weight_dtype=None):
    """Pack the Linear params into one weight slab + one f32 bias slab.

    Every weight block is padded to the full lane width NC, and hidden/output
    blocks reserve NC rows (extra rows/lanes are zero) so the kernel loads
    full (rows, NC) tiles with no per-iteration lane slicing.
    """
    w0, b0, wh, bh, wo, bo = params
    H, F, L = hidden_channels, hidden_channels_func, hidden_layers_func
    IC = input_channels
    OUT = IC * H
    if weight_dtype is None:
        weight_dtype = _default_weight_dtype()

    ROW_ALIGN = 32                       # block-start alignment (f32/bf16/fp8 safe)
    NC = _round_up(max(F, OUT), 128)     # full-lane slab width

    # Rows the kernel loads per block: first layer K=H, later layers K=NC.
    load_rows = [H] + [NC] * L + [NC]
    offs, r = [], 0
    for nrows in load_rows:
        offs.append(r)
        r = _round_up(r + nrows, ROW_ALIGN)
    R = _round_up(r, ROW_ALIGN)

    wslab = jnp.zeros((R, NC), weight_dtype)
    wslab = wslab.at[offs[0]:offs[0] + H, 0:F].set(jnp.asarray(w0, weight_dtype))
    for i in range(L):
        o = offs[1 + i]
        wslab = wslab.at[o:o + F, 0:F].set(jnp.asarray(wh[i], weight_dtype))
    o = offs[1 + L]
    wslab = wslab.at[o:o + F, 0:OUT].set(jnp.asarray(wo, weight_dtype))

    # Biases / epilogue stay f32 on every generation (v5e VPU/EUP lack bf16).
    Rb = _round_up(L + 2, 8)
    bslab = jnp.zeros((Rb, NC), jnp.float32)
    bslab = bslab.at[0, 0:F].set(jnp.asarray(b0, jnp.float32).reshape(F))
    for i in range(L):
        bslab = bslab.at[1 + i, 0:F].set(jnp.asarray(bh[i], jnp.float32).reshape(F))
    bslab = bslab.at[L + 1, 0:OUT].set(jnp.asarray(bo, jnp.float32).reshape(OUT))

    # 0/1 matrices for the optional fused f(z) @ dX/dt tail.
    l = np.arange(OUT)
    emat = np.zeros((IC, NC), np.float32)
    emat[l % IC, l] = 1.0                # lane l <- dx[l % IC]
    rmat = np.zeros((NC, H), np.float32)
    rmat[l, l // IC] = 1.0               # reduce lanes h*IC..h*IC+IC-1 -> h

    return {
        "wslab": wslab, "bslab": bslab, "w_offs": tuple(offs),
        "emat": jnp.asarray(emat), "rmat": jnp.asarray(rmat),
        "H": H, "F": F, "OUT": OUT, "NC": NC, "L": L,
        "input_channels": IC, "hidden_channels": H,
    }


# ---------------------------------------------------------------------------
# pallas_call wrapper
# ---------------------------------------------------------------------------
def _cde_apply(z2d, packed, dx2d=None):
    """z2d: (N, H) stacked rows -> (N, IC*H); or (N, H) when dx2d (N, IC) is given."""
    H, OUT, NC, L = packed["H"], packed["OUT"], packed["NC"], packed["L"]
    IC = packed["input_channels"]
    wslab, bslab = packed["wslab"], packed["bslab"]
    fused = dx2d is not None

    N = z2d.shape[0]
    TB = _choose_row_tile(N, _num_tensorcores())
    Np = _round_up(N, TB)
    grid = (Np // TB,)

    z2d = z2d.astype(wslab.dtype)          # cast matmul operand once (wrapper)
    if fused:
        dx2d = dx2d.astype(jnp.float32)
    if Np != N:                            # zero-pad rows; sliced off below
        z2d = jnp.concatenate([z2d, jnp.zeros((Np - N, H), z2d.dtype)], axis=0)
        if fused:
            dx2d = jnp.concatenate(
                [dx2d, jnp.zeros((Np - N, IC), dx2d.dtype)], axis=0)

    # Constant index_maps -> parameter slabs are DMA'd into VMEM once and stay
    # resident across all grid steps.
    def resident(arr):
        return pl.BlockSpec(arr.shape, lambda i: (0, 0))

    w_bytes = int(wslab.size) * wslab.dtype.itemsize + int(bslab.size) * 4
    mlp_flops = 2 * Np * (H * NC + L * NC * NC + NC * NC)
    cparams = pltpu.CompilerParams(dimension_semantics=("parallel",))

    if not fused:
        kernel = functools.partial(
            cde_func_kernel, H=H, OUT=OUT, NC=NC, L=L, w_offs=packed["w_offs"])
        cost = pl.CostEstimate(
            flops=mlp_flops, transcendentals=Np * OUT,
            bytes_accessed=Np * H * z2d.dtype.itemsize + Np * OUT * 4 + w_bytes)
        out = pl.pallas_call(
            kernel,
            out_shape=jax.ShapeDtypeStruct((Np, OUT), jnp.float32),
            grid_spec=pltpu.PrefetchScalarGridSpec(
                num_scalar_prefetch=0, grid=grid,
                in_specs=[
                    pl.BlockSpec((TB, H), lambda i: (i, 0)),   # z rows (tiled)
                    resident(wslab),                           # weights (resident)
                    resident(bslab),                           # biases  (resident)
                ],
                out_specs=pl.BlockSpec((TB, OUT), lambda i: (i, 0)),
            ),
            compiler_params=cparams,
            cost_estimate=cost,
        )(z2d, wslab, bslab)
    else:
        emat, rmat = packed["emat"], packed["rmat"]
        kernel = functools.partial(
            cde_func_fused_kernel, H=H, NC=NC, L=L, w_offs=packed["w_offs"])
        cost = pl.CostEstimate(
            flops=mlp_flops + 2 * Np * (IC * NC + NC * H),
            transcendentals=Np * OUT,
            bytes_accessed=(Np * (H * z2d.dtype.itemsize + IC * 4 + H * 4)
                            + w_bytes + int(emat.size + rmat.size) * 4))
        out = pl.pallas_call(
            kernel,
            out_shape=jax.ShapeDtypeStruct((Np, H), jnp.float32),
            grid_spec=pltpu.PrefetchScalarGridSpec(
                num_scalar_prefetch=0, grid=grid,
                in_specs=[
                    pl.BlockSpec((TB, H), lambda i: (i, 0)),   # z rows
                    pl.BlockSpec((TB, IC), lambda i: (i, 0)),  # dX/dt rows
                    resident(wslab), resident(bslab),
                    resident(emat), resident(rmat),
                ],
                out_specs=pl.BlockSpec((TB, H), lambda i: (i, 0)),
            ),
            compiler_params=cparams,
            cost_estimate=cost,
        )(z2d, dx2d, wslab, bslab, emat, rmat)

    if Np != N:
        out = out[:N]
    return out


def cde_func_forward(t, z, packed):
    """Module-equivalent CDEFunc.forward(t, z): z (B, H) -> (B, H, IC).

    Compatibility shim for single RHS evaluations; at small B the call is
    launch-bound -- prefer cde_func_forward_stacked for solver loops.
    """
    del t
    B = z.shape[0]
    H, IC = packed["hidden_channels"], packed["input_channels"]
    out = _cde_apply(z, packed)
    return out.reshape(B, H, IC)


def cde_func_forward_stacked(t, z_stack, packed):
    """Fused multi-evaluation call: z_stack (..., B, H) -> (..., B, H, IC).

    One pallas_call for all stacked rows; weights are DMA'd once and stay
    VMEM-resident across the whole grid.
    """
    del t
    H, IC = packed["hidden_channels"], packed["input_channels"]
    lead = z_stack.shape[:-1]
    out = _cde_apply(z_stack.reshape(-1, z_stack.shape[-1]), packed)
    return out.reshape(*lead, H, IC)


def cde_func_forward_fused(t, z_stack, dxdt_stack, packed):
    """Fused neural-CDE contraction: f(z) @ dX/dt, (...,B,H),(...,B,IC) -> (...,B,H)."""
    del t
    H = packed["hidden_channels"]
    lead = z_stack.shape[:-1]
    out = _cde_apply(z_stack.reshape(-1, z_stack.shape[-1]), packed,
                     dx2d=dxdt_stack.reshape(-1, dxdt_stack.shape[-1]))
    return out.reshape(*lead, H)


# ---------------------------------------------------------------------------
# Synthetic params + pure-JAX reference
# ---------------------------------------------------------------------------
def init_params(key, input_channels, hidden_channels, hidden_channels_func,
                hidden_layers_func):
    """Deterministic synthetic parameters (shapes match the PyTorch module)."""
    H, F, L = hidden_channels, hidden_channels_func, hidden_layers_func
    OUT = input_channels * hidden_channels
    ks = jax.random.split(key, 6)
    scale0 = 1.0 / np.sqrt(H)
    scaleh = 1.0 / np.sqrt(F)
    w0 = jax.random.uniform(ks[0], (H, F), jnp.float32, -scale0, scale0)
    b0 = jax.random.uniform(ks[1], (1, F), jnp.float32, -scale0, scale0)
    wh = jax.random.uniform(ks[2], (L, F, F), jnp.float32, -scaleh, scaleh)
    bh = jax.random.uniform(ks[3], (L, 1, F), jnp.float32, -scaleh, scaleh)
    wo = jax.random.uniform(ks[4], (F, OUT), jnp.float32, -scaleh, scaleh)
    bo = jax.random.uniform(ks[5], (1, OUT), jnp.float32, -scaleh, scaleh)
    return (w0, b0, wh, bh, wo, bo)


def reference_forward(z, params, input_channels, hidden_channels,
                      hidden_layers_func, compute_dtype=jnp.float32):
    """Pure-JAX reference mirroring the kernel's casts: matmul operands in
    `compute_dtype`, f32 accumulation, f32 bias/ReLU/tanh epilogue."""
    w0, b0, wh, bh, wo, bo = params
    cd, f32 = compute_dtype, jnp.float32
    h = jnp.dot(z.astype(cd), jnp.asarray(w0, cd), preferred_element_type=f32)
    h = jnp.maximum(h + jnp.asarray(b0, f32), 0.0)
    for i in range(hidden_layers_func):
        h = jnp.dot(h.astype(cd), jnp.asarray(wh[i], cd),
                    preferred_element_type=f32)
        h = jnp.maximum(h + jnp.asarray(bh[i], f32), 0.0)
    y = jnp.dot(h.astype(cd), jnp.asarray(wo, cd), preferred_element_type=f32)
    y = jnp.tanh(y + jnp.asarray(bo, f32))
    return y.reshape(z.shape[0], hidden_channels, input_channels)


if __name__ == "__main__":
    # Small, CDE-typical sizes.
    input_channels = 4
    hidden_channels = 32
    hidden_channels_func = 64
    hidden_layers_func = 2
    batch = 8
    num_evals = 32   # stacked solver RHS evaluations -> N = 256 rows

    key = jax.random.PRNGKey(0)
    kz, ks, kd, kp = jax.random.split(key, 4)

    params = init_params(kp, input_channels, hidden_channels,
                         hidden_channels_func, hidden_layers_func)
    packed = pack_params(params,
                         input_channels=input_channels,
                         hidden_channels=hidden_channels,
                         hidden_channels_func=hidden_channels_func,
                         hidden_layers_func=hidden_layers_func)

    # Tolerances: tight for f32 weights (v5e default); looser when the
    # generation-aware default picked bf16 matmul operands (v6e / v7x).
    wdt = packed["wslab"].dtype
    tol = dict(rtol=1e-2, atol=1e-2) if wdt == jnp.bfloat16 \
        else dict(rtol=1e-5, atol=1e-5)

    t = jnp.float32(0.0)  # unused, signature parity with the PyTorch module

    # (1) Module-equivalent single RHS evaluation: (B, H) -> (B, H, IC).
    z = jax.random.normal(kz, (batch, hidden_channels), jnp.float32)
    out = jax.block_until_ready(cde_func_forward(t, z, packed))
    ref = reference_forward(z, params, input_channels, hidden_channels,
                            hidden_layers_func, compute_dtype=wdt)
    assert out.shape == (batch, hidden_channels, input_channels)
    np.testing.assert_allclose(np.asarray(out), np.asarray(ref), **tol)

    # (2) Stacked multi-evaluation call (preferred solver entry point).
    zs = jax.random.normal(ks, (num_evals, batch, hidden_channels), jnp.float32)
    ts = jnp.zeros((num_evals,), jnp.float32)
    outs = jax.block_until_ready(cde_func_forward_stacked(ts, zs, packed))
    refs = reference_forward(zs.reshape(-1, hidden_channels), params,
                             input_channels, hidden_channels,
                             hidden_layers_func, compute_dtype=wdt)
    refs = refs.reshape(num_evals, batch, hidden_channels, input_channels)
    assert outs.shape == (num_evals, batch, hidden_channels, input_channels)
    np.testing.assert_allclose(np.asarray(outs), np.asarray(refs), **tol)

    # (3) Fused CDE contraction f(z) @ dX/dt -> (..., B, H): no HBM round-trip
    #     of the (N, H*IC) intermediate and no separate XLA einsum.
    dxs = jax.random.normal(kd, (num_evals, batch, input_channels), jnp.float32)
    outf = jax.block_until_ready(cde_func_forward_fused(ts, zs, dxs, packed))
    ref_fused = jnp.einsum(
        "nhi,ni->nh",
        refs.reshape(-1, hidden_channels, input_channels),
        dxs.reshape(-1, input_channels)).reshape(num_evals, batch,
                                                 hidden_channels)
    assert outf.shape == (num_evals, batch, hidden_channels)
    np.testing.assert_allclose(np.asarray(outf), np.asarray(ref_fused), **tol)

    # (4) Non-multiple-of-tile row count exercises the zero-padding path.
    z_odd = jax.random.normal(jax.random.PRNGKey(1), (20, hidden_channels),
                              jnp.float32)
    out_odd = jax.block_until_ready(cde_func_forward(t, z_odd, packed))
    ref_odd = reference_forward(z_odd, params, input_channels, hidden_channels,
                                hidden_layers_func, compute_dtype=wdt)
    np.testing.assert_allclose(np.asarray(out_odd), np.asarray(ref_odd), **tol)

    print("KERNEL_OK")
</pallas_src>

<mosaic_0001>
module attributes {stable_mosaic.version = 11 : i64} {
  func.func @cde_func_kernel(%arg0: i32, %arg1: memref<16x32xf32, #tpu.memory_space<vmem>>, %arg2: memref<416x128xf32, #tpu.memory_space<vmem>>, %arg3: memref<8x128xf32, #tpu.memory_space<vmem>>, %arg4: memref<16x128xf32, #tpu.memory_space<vmem>>) attributes {dimension_semantics = [#tpu.dimension_semantics<parallel>], iteration_bounds = array<i64: 1>, scalar_prefetch = 0 : i64, scratch_operands = 0 : i64, tpu.core_type = #tpu.core_type<tc>, window_params = [{transform_indices = @transform_0, window_bounds = array<i64: 16, 32>}, {pipeline_mode = #tpu.pipeline_mode<synchronous>, transform_indices = @transform_1, window_bounds = array<i64: 416, 128>}, {pipeline_mode = #tpu.pipeline_mode<synchronous>, transform_indices = @transform_2, window_bounds = array<i64: 8, 128>}, {transform_indices = @transform_3, window_bounds = array<i64: 16, 128>}]} {
    %c0 = arith.constant 0 : index
    %c0_0 = arith.constant 0 : index
    %0 = vector.load %arg3[%c0, %c0_0] : memref<8x128xf32, #tpu.memory_space<vmem>>, vector<8x128xf32>
    %c0_1 = arith.constant 0 : index
    %c0_2 = arith.constant 0 : index
    %1 = vector.load %arg1[%c0_1, %c0_2] : memref<16x32xf32, #tpu.memory_space<vmem>>, vector<16x32xf32>
    %c0_3 = arith.constant 0 : index
    %c0_4 = arith.constant 0 : index
    %2 = vector.load %arg2[%c0_3, %c0_4] : memref<416x128xf32, #tpu.memory_space<vmem>>, vector<32x128xf32>
    %cst = arith.constant dense<0.000000e+00> : vector<16x128xf32>
    %3 = tpu.matmul %1, %2, %cst {dimension_numbers = #tpu.dot_dimension_numbers<[1], [0], [0], [1], [0, 0, 1, 1], [], []>} : vector<16x32xf32>, vector<32x128xf32>, vector<16x128xf32> -> vector<16x128xf32>
    %4 = vector.extract_strided_slice %0 {offsets = [0, 0], sizes = [1, 128], strides = [1, 1]} : vector<8x128xf32> to vector<1x128xf32>
    %5 = vector.broadcast %4 : vector<1x128xf32> to vector<16x128xf32>
    %6 = arith.addf %3, %5 : vector<16x128xf32>
    %cst_5 = arith.constant 0.000000e+00 : f32
    %7 = vector.broadcast %cst_5 : f32 to vector<16x128xf32>
    %8 = arith.maximumf %6, %7 : vector<16x128xf32>
    %c32 = arith.constant 32 : index
    %c0_6 = arith.constant 0 : index
    %9 = vector.load %arg2[%c32, %c0_6] : memref<416x128xf32, #tpu.memory_space<vmem>>, vector<128x128xf32>
    %cst_7 = arith.constant dense<0.000000e+00> : vector<16x128xf32>
    %10 = tpu.matmul %8, %9, %cst_7 {dimension_numbers = #tpu.dot_dimension_numbers<[1], [0], [0], [1], [0, 0, 1, 1], [], []>} : vector<16x128xf32>, vector<128x128xf32>, vector<16x128xf32> -> vector<16x128xf32>
    %11 = vector.extract_strided_slice %0 {offsets = [1, 0], sizes = [1, 128], strides = [1, 1]} : vector<8x128xf32> to vector<1x128xf32>
    %12 = vector.broadcast %11 : vector<1x128xf32> to vector<16x128xf32>
    %13 = arith.addf %10, %12 : vector<16x128xf32>
    %cst_8 = arith.constant 0.000000e+00 : f32
    %14 = vector.broadcast %cst_8 : f32 to vector<16x128xf32>
    %15 = arith.maximumf %13, %14 : vector<16x128xf32>
    %c160 = arith.constant 160 : index
    %c0_9 = arith.constant 0 : index
    %16 = vector.load %arg2[%c160, %c0_9] : memref<416x128xf32, #tpu.memory_space<vmem>>, vector<128x128xf32>
    %cst_10 = arith.constant dense<0.000000e+00> : vector<16x128xf32>
    %17 = tpu.matmul %15, %16, %cst_10 {dimension_numbers = #tpu.dot_dimension_numbers<[1], [0], [0], [1], [0, 0, 1, 1], [], []>} : vector<16x128xf32>, vector<128x128xf32>, vector<16x128xf32> -> vector<16x128xf32>
    %18 = vector.extract_strided_slice %0 {offsets = [2, 0], sizes = [1, 128], strides = [1, 1]} : vector<8x128xf32> to vector<1x128xf32>
    %19 = vector.broadcast %18 : vector<1x128xf32> to vector<16x128xf32>
    %20 = arith.addf %17, %19 : vector<16x128xf32>
    %cst_11 = arith.constant 0.000000e+00 : f32
    %21 = vector.broadcast %cst_11 : f32 to vector<16x128xf32>
    %22 = arith.maximumf %20, %21 : vector<16x128xf32>
    %c288 = arith.constant 288 : index
    %c0_12 = arith.constant 0 : index
    %23 = vector.load %arg2[%c288, %c0_12] : memref<416x128xf32, #tpu.memory_space<vmem>>, vector<128x128xf32>
    %cst_13 = arith.constant dense<0.000000e+00> : vector<16x128xf32>
    %24 = tpu.matmul %22, %23, %cst_13 {dimension_numbers = #tpu.dot_dimension_numbers<[1], [0], [0], [1], [0, 0, 1, 1], [], []>} : vector<16x128xf32>, vector<128x128xf32>, vector<16x128xf32> -> vector<16x128xf32>
    %25 = vector.extract_strided_slice %0 {offsets = [3, 0], sizes = [1, 128], strides = [1, 1]} : vector<8x128xf32> to vector<1x128xf32>
    %26 = vector.broadcast %25 : vector<1x128xf32> to vector<16x128xf32>
    %27 = arith.addf %24, %26 : vector<16x128xf32>
    %28 = math.tanh %27 : vector<16x128xf32>
    %c0_14 = arith.constant 0 : index
    %c0_15 = arith.constant 0 : index
    %29 = vector.load %arg4[%c0_14, %c0_15] : memref<16x128xf32, #tpu.memory_space<vmem>>, vector<16x128xf32>
    tpu.vector_store %arg4[%c0_14, %c0_15], %28 {strides = array<i32>} : memref<16x128xf32, #tpu.memory_space<vmem>>, vector<16x128xf32>,
    return
  }
  func.func @transform_0(%arg0: i32) -> (i32, i32) {
    %c0_i32 = arith.constant 0 : i32
    %c0_i32_0 = arith.constant 0 : i32
    return %arg0, %c0_i32 : i32, i32
  }
  func.func @transform_1(%arg0: i32) -> (i32, i32) {
    %c0_i32 = arith.constant 0 : i32
    %c0_i32_0 = arith.constant 0 : i32
    %c0_i32_1 = arith.constant 0 : i32
    return %c0_i32, %c0_i32_0 : i32, i32
  }
  func.func @transform_2(%arg0: i32) -> (i32, i32) {
    %c0_i32 = arith.constant 0 : i32
    %c0_i32_0 = arith.constant 0 : i32
    %c0_i32_1 = arith.constant 0 : i32
    return %c0_i32, %c0_i32_0 : i32, i32
  }
  func.func @transform_3(%arg0: i32) -> (i32, i32) {
    %c0_i32 = arith.constant 0 : i32
    %c0_i32_0 = arith.constant 0 : i32
    return %arg0, %c0_i32 : i32, i32
  }
}

</mosaic_0001>

<llo_original>
// kernel: tpu_custom_call.1
$region0: #{tpu_custom_call.1}
  #allocation0 [shape = 'u32[]', space=smem, size = 0x4, offset = 0x4, fixed_abs, tag = 'smem constant byte address 0x4 - core index']
  #allocation1 [shape = 'u32[144,128]{1,0:T(1,128)}', space=vmem, size = 0x12000, scoped, tag = 'internal scratch']
  %s0 = inlined_call_operand.hbm [shape: f32[16,32], index: 0, kind: input, shape index: {}]
  %s1 = inlined_call_operand.hbm [shape: f32[416,128], index: 1, kind: input, shape index: {}]
  %s2 = inlined_call_operand.hbm [shape: f32[8,128], index: 2, kind: input, shape index: {}]
  %s3 = inlined_call_operand.hbm [shape: f32[16,128], index: 3, kind: output, shape index: {}]
  %s4 = sld [smem:[#allocation0]]
  $region34: #{tpu_custom_call.1} parent=0
    _
  %s6 = ssub.s32 1, %s4
  %s7 = scalar_select 0, %s6, %s4
  $region1: #{tpu_custom_call.1} parent=0
    #allocation2 [shape = 'u8[8192]{0}', space=vmem, size = 0x2000, scoped, tag = 'input window, operand 0, single buffered']
    #allocation3 [shape = 's32[1]{0}', space=sflag, size = 0x4, scoped, tag = 'scoped memory for tpu_custom_call.1']
    #allocation4 [shape = 's32[1]{0}', space=sflag, size = 0x4, scoped, tag = 'scoped memory for tpu_custom_call.1']
    #allocation5 [shape = 'u8[212992]{0}', space=vmem, size = 0x34000, scoped, tag = 'input window, operand 1, single buffered']
    #allocation6 [shape = 's32[1]{0}', space=sflag, size = 0x4, scoped, tag = 'scoped memory for tpu_custom_call.1']
    #allocation7 [shape = 'u8[4096]{0}', space=vmem, size = 0x1000, scoped, tag = 'input window, operand 2, single buffered']
    #allocation8 [shape = 'u8[8192]{0}', space=vmem, size = 0x2000, scoped, tag = 'output window, operand 0, single buffered']
    %8 = vsyncpa [#allocation3], 0
    %9 = vsyncpa [#allocation6], 0
    %10 = vsyncpa [#allocation4], 0
    // Predicated region
    $region2: #{tpu_custom_call.1} parent=1 // pred_check
      _
    $region3: #{tpu_custom_call.1} parent=1 // pred_check_branch
      %12 = sbr.rel (0) target = $region5
    $region4: #{tpu_custom_call.1} parent=1 // pred_region
      %s14 = ssub.s32 256, 256
      %15 = vsyncadd [#allocation3], %s14
      %s16 = sshll.u32 [#allocation2], 4
      %s17 = int_to_ptr.vmem [resolvable:$true] %s16
      %22 = dma.hbm_to_vmem [thread:$0]  %s0, 256, %s17, [#allocation3], 128, 128, 8
    $region5: #{tpu_custom_call.1} parent=1 // pred_fallthru
      _
    // Predicated region
    $region6: #{tpu_custom_call.1} parent=1 // pred_check
      _
    $region7: #{tpu_custom_call.1} parent=1 // pred_check_branch
      %24 = sbr.rel (0) target = $region9
    $region8: #{tpu_custom_call.1} parent=1 // pred_region
      %s26 = ssub.s32 6656, 6656
      %27 = vsyncadd [#allocation6], %s26
      %s28 = sshll.u32 [#allocation5], 4
      %s29 = int_to_ptr.vmem [resolvable:$true] %s28
      %34 = dma.hbm_to_vmem [thread:$0]  %s1, 6656, %s29, [#allocation6], 128, 128, 8
    $region9: #{tpu_custom_call.1} parent=1 // pred_fallthru
      _
    // Predicated region
    $region10: #{tpu_custom_call.1} parent=1 // pred_check
      _
    $region11: #{tpu_custom_call.1} parent=1 // pred_check_branch
      %36 = sbr.rel (0) target = $region13
    $region12: #{tpu_custom_call.1} parent=1 // pred_region
      %s38 = ssub.s32 128, 128
      %39 = vsyncadd [#allocation6], %s38
      %s41 = sshll.u32 [#allocation7], 4
      %s42 = int_to_ptr.vmem [resolvable:$true] %s41
      %44 = dma.hbm_to_vmem [thread:$0]  %s2, 128, %s42, [#allocation6]
    $region13: #{tpu_custom_call.1} parent=1 // pred_fallthru
      _
    // Predicated region
    $region14: #{tpu_custom_call.1} parent=1 // pred_check
      _
    $region15: #{tpu_custom_call.1} parent=1 // pred_check_branch
      %46 = sbr.rel (0) target = $region17
    $region16: #{tpu_custom_call.1} parent=1 // pred_region
      %47 = dma.done [#allocation3], 256
    $region17: #{tpu_custom_call.1} parent=1 // pred_fallthru
      _
    // Predicated region
    $region18: #{tpu_custom_call.1} parent=1 // pred_check
      _
    $region19: #{tpu_custom_call.1} parent=1 // pred_check_branch
      %49 = sbr.rel (0) target = $region21
    $region20: #{tpu_custom_call.1} parent=1 // pred_region
      %50 = dma.done [#allocation6], 6656
    $region21: #{tpu_custom_call.1} parent=1 // pred_fallthru
      _
    // Predicated region
    $region22: #{tpu_custom_call.1} parent=1 // pred_check
      _
    $region23: #{tpu_custom_call.1} parent=1 // pred_check_branch
      %52 = sbr.rel (0) target = $region25
    $region24: #{tpu_custom_call.1} parent=1 // pred_region
      %53 = dma.done [#allocation6], 128
    $region25: #{tpu_custom_call.1} parent=1 // pred_fallthru
      _
    %v54 = vld [vmem:[#allocation7] sm:$0xff]
    %v55 = vld [vmem:[#allocation2] sm:$0xff]
    %v56 = vld [vmem:[#allocation2 + $0x8] sm:$0xff]
    %v57 = vld [vmem:[#allocation5] sm:$0xff]
    %v58 = vld [vmem:[#allocation5 + $0x8] sm:$0xff]
    %v59 = vld [vmem:[#allocation5 + $0x10] sm:$0xff]
    %v60 = vld [vmem:[#allocation5 + $0x18] sm:$0xff]
    %v61 = vlaneseq
    %v62 = vshrl.u32 %v61, 7
    %v63 = vsub.s32 0, %v62
    %v64 = vrot.slane %v54, %v63
    %vm65 = vcmask 261120
    %v67 = vsel %vm65, %v55, 0
    %v70 = vsel %vm65, %v56, 0
    %72 = vmatprep.subr.mxu0 0.0
    %73 = vmatpush1.msra.mxu0 0.0
    %74 = vmatprep.subr.mxu0 0.0
    %75 = vmatpush1.msra.mxu0 0.0
    %76 = vmatprep.subr.mxu0 0.0
    %77 = vmatpush1.msra.mxu0 0.0
    %78 = vmatprep.subr.mxu0 0.0
    %79 = vmatpush1.msra.mxu0 0.0
    %80 = vmatprep.subr.mxu0 0.0
    %81 = vmatpush1.msra.mxu0 0.0
    %82 = vmatprep.subr.mxu0 0.0
    %83 = vmatpush1.msra.mxu0 0.0
    %84 = vmatprep.subr.mxu0 0.0
    %85 = vmatpush1.msra.mxu0 0.0
    %86 = vmatprep.subr.mxu0 0.0
    %87 = vmatpush1.msra.mxu0 0.0
    %88 = vmatprep.subr.mxu0 0.0
    %89 = vmatpush1.msra.mxu0 0.0
    %90 = vmatprep.subr.mxu0 0.0
    %91 = vmatpush1.msra.mxu0 0.0
    %92 = vmatprep.subr.mxu0 0.0
    %93 = vmatpush1.msra.mxu0 0.0
    %94 = vmatprep.subr.mxu0 0.0
    %95 = vmatpush1.msra.mxu0 0.0
    %96 = vmatprep.subr.mxu0 0.0
    %97 = vmatpush1.msra.mxu0 %v60
    %98 = vmatprep.subr.mxu0 0.0
    %99 = vmatpush1.msra.mxu0 %v59
    %100 = vmatprep.subr.mxu0 0.0
    %101 = vmatpush1.msra.mxu0 %v58
    %102 = vmatprep.subr.mxu0 0.0
    %103 = vmatpush1.msra.mxu0 %v57
    %104 = vmatprep.subr.mxu0 0.0
    %105 = vmatpush2.msra.mxu0 0.0
    %106 = vmatprep.subr.mxu0 0.0
    %107 = vmatpush2.msra.mxu0 0.0
    %108 = vmatprep.subr.mxu0 0.0
    %109 = vmatpush2.msra.mxu0 0.0
    %110 = vmatprep.subr.mxu0 0.0
    %111 = vmatpush2.msra.mxu0 0.0
    %112 = vmatprep.subr.mxu0 0.0
    %113 = vmatpush2.msra.mxu0 0.0
    %114 = vmatprep.subr.mxu0 0.0
    %115 = vmatpush2.msra.mxu0 0.0
    %116 = vmatprep.subr.mxu0 0.0
    %117 = vmatpush2.msra.mxu0 0.0
    %118 = vmatprep.subr.mxu0 0.0
    %119 = vmatpush2.msra.mxu0 0.0
    %120 = vmatprep.subr.mxu0 0.0
    %121 = vmatpush2.msra.mxu0 0.0
    %122 = vmatprep.subr.mxu0 0.0
    %123 = vmatpush2.msra.mxu0 0.0
    %124 = vmatprep.subr.mxu0 0.0
    %125 = vmatpush2.msra.mxu0 0.0
    %126 = vmatprep.subr.mxu0 0.0
    %127 = vmatpush2.msra.mxu0 0.0
    %128 = vmatprep.subr.mxu0 0.0
    %129 = vmatpush2.msra.mxu0 0.0
    %130 = vmatprep.subr.mxu0 0.0
    %131 = vmatpush2.msra.mxu0 0.0
    %132 = vmatprep.subr.mxu0 0.0
    %133 = vmatpush2.msra.mxu0 0.0
    %134 = vmatprep.subr.mxu0 0.0
    %135 = vmatpush2.msra.mxu0 0.0
    %136 = vmatprep.mubr.f32.mxu0 0.0
    %137 = vmatmul.mubr.f32.gmra.mxu0 %v67
    %v138 = vpop.f32.mrf.mxu0
    %v139 = vadd.f32 %v64, %v138
    %v140 = vpop.f32.mrf.mxu0
    %141 = vmatprep.mubr.f32.mxu0 0.0
    %142 = vmatmul.mubr.f32.gmra.mxu0 %v70
    %v143 = vpop.f32.mrf.mxu0
    %v144 = vadd.f32 %v64, %v143
    %v145 = vpop.f32.mrf.mxu0
    %146 = vdwg.mxu0
    %v147 = vmax.f32 %v139, 0.0
    %v148 = vmax.f32 %v144, 0.0
    %v149 = vld [vmem:[#allocation5 + $0x20] sm:$0xff]
    %v150 = vld [vmem:[#allocation5 + $0x28] sm:$0xff]
    %v151 = vld [vmem:[#allocation5 + $0x30] sm:$0xff]
    %v152 = vld [vmem:[#allocation5 + $0x38] sm:$0xff]
    %v153 = vld [vmem:[#allocation5 + $0x40] sm:$0xff]
    %v154 = vld [vmem:[#allocation5 + $0x48] sm:$0xff]
    %v155 = vld [vmem:[#allocation5 + $0x50] sm:$0xff]
    %v156 = vld [vmem:[#allocation5 + $0x58] sm:$0xff]
    %v157 = vld [vmem:[#allocation5 + $0x60] sm:$0xff]
    %v158 = vld [vmem:[#allocation5 + $0x68] sm:$0xff]
    %v159 = vld [vmem:[#allocation5 + $0x70] sm:$0xff]
    %v160 = vld [vmem:[#allocation5 + $0x78] sm:$0xff]
    %v161 = vld [vmem:[#allocation5 + $0x80] sm:$0xff]
    %v162 = vld [vmem:[#allocation5 + $0x88] sm:$0xff]
    %v163 = vld [vmem:[#allocation5 + $0x90] sm:$0xff]
    %v164 = vld [vmem:[#allocation5 + $0x98] sm:$0xff]
    %v165 = vlaneseq
    %v166 = vshrl.u32 %v165, 7
    %v167 = vsub.s32 1, %v166
    %v168 = vrot.slane %v54, %v167
    %169 = vmatprep.subr.mxu0 0.0
    %170 = vmatpush1.msra.mxu0 %v164
    %171 = vmatprep.subr.mxu0 0.0
    %172 = vmatpush1.msra.mxu0 %v163
    %173 = vmatprep.subr.mxu0 0.0
    %174 = vmatpush1.msra.mxu0 %v162
    %175 = vmatprep.subr.mxu0 0.0
    %176 = vmatpush1.msra.mxu0 %v161
    %177 = vmatprep.subr.mxu0 0.0
    %178 = vmatpush1.msra.mxu0 %v160
    %179 = vmatprep.subr.mxu0 0.0
    %180 = vmatpush1.msra.mxu0 %v159
    %181 = vmatprep.subr.mxu0 0.0
    %182 = vmatpush1.msra.mxu0 %v158
    %183 = vmatprep.subr.mxu0 0.0
    %184 = vmatpush1.msra.mxu0 %v157
    %185 = vmatprep.subr.mxu0 0.0
    %186 = vmatpush1.msra.mxu0 %v156
    %187 = vmatprep.subr.mxu0 0.0
    %188 = vmatpush1.msra.mxu0 %v155
    %189 = vmatprep.subr.mxu0 0.0
    %190 = vmatpush1.msra.mxu0 %v154
    %191 = vmatprep.subr.mxu0 0.0
    %192 = vmatpush1.msra.mxu0 %v153
    %193 = vmatprep.subr.mxu0 0.0
    %194 = vmatpush1.msra.mxu0 %v152
    %195 = vmatprep.subr.mxu0 0.0
    %196 = vmatpush1.msra.mxu0 %v151
    %197 = vmatprep.subr.mxu0 0.0
    %198 = vmatpush1.msra.mxu0 %v150
    %199 = vmatprep.subr.mxu0 0.0
    %200 = vmatpush1.msra.mxu0 %v149
    %201 = vmatprep.subr.mxu0 0.0
    %202 = vmatpush2.msra.mxu0 0.0
    %203 = vmatprep.subr.mxu0 0.0
    %204 = vmatpush2.msra.mxu0 0.0
    %205 = vmatprep.subr.mxu0 0.0
    %206 = vmatpush2.msra.mxu0 0.0
    %207 = vmatprep.subr.mxu0 0.0
    %208 = vmatpush2.msra.mxu0 0.0
    %209 = vmatprep.subr.mxu0 0.0
    %210 = vmatpush2.msra.mxu0 0.0
    %211 = vmatprep.subr.mxu0 0.0
    %212 = vmatpush2.msra.mxu0 0.0
    %213 = vmatprep.subr.mxu0 0.0
    %214 = vmatpush2.msra.mxu0 0.0
    %215 = vmatprep.subr.mxu0 0.0
    %216 = vmatpush2.msra.mxu0 0.0
    %217 = vmatprep.subr.mxu0 0.0
    %218 = vmatpush2.msra.mxu0 0.0
    %219 = vmatprep.subr.mxu0 0.0
    %220 = vmatpush2.msra.mxu0 0.0
    %221 = vmatprep.subr.mxu0 0.0
    %222 = vmatpush2.msra.mxu0 0.0
    %223 = vmatprep.subr.mxu0 0.0
    %224 = vmatpush2.msra.mxu0 0.0
    %225 = vmatprep.subr.mxu0 0.0
    %226 = vmatpush2.msra.mxu0 0.0
    %227 = vmatprep.subr.mxu0 0.0
    %228 = vmatpush2.msra.mxu0 0.0
    %229 = vmatprep.subr.mxu0 0.0
    %230 = vmatpush2.msra.mxu0 0.0
    %231 = vmatprep.subr.mxu0 0.0
    %232 = vmatpush2.msra.mxu0 0.0
    %233 = vmatprep.mubr.f32.mxu0 0.0
    %234 = vmatmul.mubr.f32.gmra.mxu0 %v147
    %v235 = vpop.f32.mrf.mxu0
    %v236 = vadd.f32 %v168, %v235
    %v237 = vpop.f32.mrf.mxu0
    %238 = vmatprep.mubr.f32.mxu0 0.0
    %239 = vmatmul.mubr.f32.gmra.mxu0 %v148
    %v240 = vpop.f32.mrf.mxu0
    %v241 = vadd.f32 %v168, %v240
    %v242 = vpop.f32.mrf.mxu0
    %243 = vdwg.mxu0
    %v244 = vmax.f32 %v236, 0.0
    %v245 = vmax.f32 %v241, 0.0
    %v246 = vld [vmem:[#allocation5 + $0xa0] sm:$0xff]
    %v247 = vld [vmem:[#allocation5 + $0xa8] sm:$0xff]
    %v248 = vld [vmem:[#allocation5 + $0xb0] sm:$0xff]
    %v249 = vld [vmem:[#allocation5 + $0xb8] sm:$0xff]
    %v250 = vld [vmem:[#allocation5 + $0xc0] sm:$0xff]
    %v251 = vld [vmem:[#allocation5 + $0xc8] sm:$0xff]
    %v252 = vld [vmem:[#allocation5 + $0xd0] sm:$0xff]
    %v253 = vld [vmem:[#allocation5 + $0xd8] sm:$0xff]
    %v254 = vld [vmem:[#allocation5 + $0xe0] sm:$0xff]
    %v255 = vld [vmem:[#allocation5 + $0xe8] sm:$0xff]
    %v256 = vld [vmem:[#allocation5 + $0xf0] sm:$0xff]
    %v257 = vld [vmem:[#allocation5 + $0xf8] sm:$0xff]
    %v258 = vld [vmem:[#allocation5 + $0x100] sm:$0xff]
    %v259 = vld [vmem:[#allocation5 + $0x108] sm:$0xff]
    %v260 = vld [vmem:[#allocation5 + $0x110] sm:$0xff]
    %v261 = vld [vmem:[#allocation5 + $0x118] sm:$0xff]
    %v262 = vlaneseq
    %v263 = vshrl.u32 %v262, 7
    %v264 = vsub.s32 2, %v263
    %v265 = vrot.slane %v54, %v264
    %266 = vmatprep.subr.mxu0 0.0
    %267 = vmatpush1.msra.mxu0 %v261
    %268 = vmatprep.subr.mxu0 0.0
    %269 = vmatpush1.msra.mxu0 %v260
    %270 = vmatprep.subr.mxu0 0.0
    %271 = vmatpush1.msra.mxu0 %v259
    %272 = vmatprep.subr.mxu0 0.0
    %273 = vmatpush1.msra.mxu0 %v258
    %274 = vmatprep.subr.mxu0 0.0
    %275 = vmatpush1.msra.mxu0 %v257
    %276 = vmatprep.subr.mxu0 0.0
    %277 = vmatpush1.msra.mxu0 %v256
    %278 = vmatprep.subr.mxu0 0.0
    %279 = vmatpush1.msra.mxu0 %v255
    %280 = vmatprep.subr.mxu0 0.0
    %281 = vmatpush1.msra.mxu0 %v254
    %282 = vmatprep.subr.mxu0 0.0
    %283 = vmatpush1.msra.mxu0 %v253
    %284 = vmatprep.subr.mxu0 0.0
    %285 = vmatpush1.msra.mxu0 %v252
    %286 = vmatprep.subr.mxu0 0.0
    %287 = vmatpush1.msra.mxu0 %v251
    %288 = vmatprep.subr.mxu0 0.0
    %289 = vmatpush1.msra.mxu0 %v250
    %290 = vmatprep.subr.mxu0 0.0
    %291 = vmatpush1.msra.mxu0 %v249
    %292 = vmatprep.subr.mxu0 0.0
    %293 = vmatpush1.msra.mxu0 %v248
    %294 = vmatprep.subr.mxu0 0.0
    %295 = vmatpush1.msra.mxu0 %v247
    %296 = vmatprep.subr.mxu0 0.0
    %297 = vmatpush1.msra.mxu0 %v246
    %298 = vmatprep.subr.mxu0 0.0
    %299 = vmatpush2.msra.mxu0 0.0
    %300 = vmatprep.subr.mxu0 0.0
    %301 = vmatpush2.msra.mxu0 0.0
    %302 = vmatprep.subr.mxu0 0.0
    %303 = vmatpush2.msra.mxu0 0.0
    %304 = vmatprep.subr.mxu0 0.0
    %305 = vmatpush2.msra.mxu0 0.0
    %306 = vmatprep.subr.mxu0 0.0
    %307 = vmatpush2.msra.mxu0 0.0
    %308 = vmatprep.subr.mxu0 0.0
    %309 = vmatpush2.msra.mxu0 0.0
    %310 = vmatprep.subr.mxu0 0.0
    %311 = vmatpush2.msra.mxu0 0.0
    %312 = vmatprep.subr.mxu0 0.0
    %313 = vmatpush2.msra.mxu0 0.0
    %314 = vmatprep.subr.mxu0 0.0
    %315 = vmatpush2.msra.mxu0 0.0
    %316 = vmatprep.subr.mxu0 0.0
    %317 = vmatpush2.msra.mxu0 0.0
    %318 = vmatprep.subr.mxu0 0.0
    %319 = vmatpush2.msra.mxu0 0.0
    %320 = vmatprep.subr.mxu0 0.0
    %321 = vmatpush2.msra.mxu0 0.0
    %322 = vmatprep.subr.mxu0 0.0
    %323 = vmatpush2.msra.mxu0 0.0
    %324 = vmatprep.subr.mxu0 0.0
    %325 = vmatpush2.msra.mxu0 0.0
    %326 = vmatprep.subr.mxu0 0.0
    %327 = vmatpush2.msra.mxu0 0.0
    %328 = vmatprep.subr.mxu0 0.0
    %329 = vmatpush2.msra.mxu0 0.0
    %330 = vmatprep.mubr.f32.mxu0 0.0
    %331 = vmatmul.mubr.f32.gmra.mxu0 %v244
    %v332 = vpop.f32.mrf.mxu0
    %v333 = vadd.f32 %v265, %v332
    %v334 = vpop.f32.mrf.mxu0
    %335 = vmatprep.mubr.f32.mxu0 0.0
    %336 = vmatmul.mubr.f32.gmra.mxu0 %v245
    %v337 = vpop.f32.mrf.mxu0
    %v338 = vadd.f32 %v265, %v337
    %v339 = vpop.f32.mrf.mxu0
    %340 = vdwg.mxu0
    %v341 = vmax.f32 %v333, 0.0
    %v342 = vmax.f32 %v338, 0.0
    %v343 = vld [vmem:[#allocation5 + $0x120] sm:$0xff]
    %v344 = vld [vmem:[#allocation5 + $0x128] sm:$0xff]
    %v345 = vld [vmem:[#allocation5 + $0x130] sm:$0xff]
    %v346 = vld [vmem:[#allocation5 + $0x138] sm:$0xff]
    %v347 = vld [vmem:[#allocation5 + $0x140] sm:$0xff]
    %v348 = vld [vmem:[#allocation5 + $0x148] sm:$0xff]
    %v349 = vld [vmem:[#allocation5 + $0x150] sm:$0xff]
    %v350 = vld [vmem:[#allocation5 + $0x158] sm:$0xff]
    %v351 = vld [vmem:[#allocation5 + $0x160] sm:$0xff]
    %v352 = vld [vmem:[#allocation5 + $0x168] sm:$0xff]
    %v353 = vld [vmem:[#allocation5 + $0x170] sm:$0xff]
    %v354 = vld [vmem:[#allocation5 + $0x178] sm:$0xff]
    %v355 = vld [vmem:[#allocation5 + $0x180] sm:$0xff]
    %v356 = vld [vmem:[#allocation5 + $0x188] sm:$0xff]
    %v357 = vld [vmem:[#allocation5 + $0x190] sm:$0xff]
    %v358 = vld [vmem:[#allocation5 + $0x198] sm:$0xff]
    %v359 = vlaneseq
    %v360 = vshrl.u32 %v359, 7
    %v361 = vsub.s32 3, %v360
    %v362 = vrot.slane %v54, %v361
    %363 = vmatprep.subr.mxu0 0.0
    %364 = vmatpush1.msra.mxu0 %v358
    %365 = vmatprep.subr.mxu0 0.0
    %366 = vmatpush1.msra.mxu0 %v357
    %367 = vmatprep.subr.mxu0 0.0
    %368 = vmatpush1.msra.mxu0 %v356
    %369 = vmatprep.subr.mxu0 0.0
    %370 = vmatpush1.msra.mxu0 %v355
    %371 = vmatprep.subr.mxu0 0.0
    %372 = vmatpush1.msra.mxu0 %v354
    %373 = vmatprep.subr.mxu0 0.0
    %374 = vmatpush1.msra.mxu0 %v353
    %375 = vmatprep.subr.mxu0 0.0
    %376 = vmatpush1.msra.mxu0 %v352
    %377 = vmatprep.subr.mxu0 0.0
    %378 = vmatpush1.msra.mxu0 %v351
    %379 = vmatprep.subr.mxu0 0.0
    %380 = vmatpush1.msra.mxu0 %v350
    %381 = vmatprep.subr.mxu0 0.0
    %382 = vmatpush1.msra.mxu0 %v349
    %383 = vmatprep.subr.mxu0 0.0
    %384 = vmatpush1.msra.mxu0 %v348
    %385 = vmatprep.subr.mxu0 0.0
    %386 = vmatpush1.msra.mxu0 %v347
    %387 = vmatprep.subr.mxu0 0.0
    %388 = vmatpush1.msra.mxu0 %v346
    %389 = vmatprep.subr.mxu0 0.0
    %390 = vmatpush1.msra.mxu0 %v345
    %391 = vmatprep.subr.mxu0 0.0
    %392 = vmatpush1.msra.mxu0 %v344
    %393 = vmatprep.subr.mxu0 0.0
    %394 = vmatpush1.msra.mxu0 %v343
    %395 = vmatprep.subr.mxu0 0.0
    %396 = vmatpush2.msra.mxu0 0.0
    %397 = vmatprep.subr.mxu0 0.0
    %398 = vmatpush2.msra.mxu0 0.0
    %399 = vmatprep.subr.mxu0 0.0
    %400 = vmatpush2.msra.mxu0 0.0
    %401 = vmatprep.subr.mxu0 0.0
    %402 = vmatpush2.msra.mxu0 0.0
    %403 = vmatprep.subr.mxu0 0.0
    %404 = vmatpush2.msra.mxu0 0.0
    %405 = vmatprep.subr.mxu0 0.0
    %406 = vmatpush2.msra.mxu0 0.0
    %407 = vmatprep.subr.mxu0 0.0
    %408 = vmatpush2.msra.mxu0 0.0
    %409 = vmatprep.subr.mxu0 0.0
    %410 = vmatpush2.msra.mxu0 0.0
    %411 = vmatprep.subr.mxu0 0.0
    %412 = vmatpush2.msra.mxu0 0.0
    %413 = vmatprep.subr.mxu0 0.0
    %414 = vmatpush2.msra.mxu0 0.0
    %415 = vmatprep.subr.mxu0 0.0
    %416 = vmatpush2.msra.mxu0 0.0
    %417 = vmatprep.subr.mxu0 0.0
    %418 = vmatpush2.msra.mxu0 0.0
    %419 = vmatprep.subr.mxu0 0.0
    %420 = vmatpush2.msra.mxu0 0.0
    %421 = vmatprep.subr.mxu0 0.0
    %422 = vmatpush2.msra.mxu0 0.0
    %423 = vmatprep.subr.mxu0 0.0
    %424 = vmatpush2.msra.mxu0 0.0
    %425 = vmatprep.subr.mxu0 0.0
    %426 = vmatpush2.msra.mxu0 0.0
    %427 = vmatprep.mubr.f32.mxu0 0.0
    %428 = vmatmul.mubr.f32.gmra.mxu0 %v341
    %v429 = vpop.f32.mrf.mxu0
    %v430 = vadd.f32 %v362, %v429
    %v431 = vpop.f32.mrf.mxu0
    %432 = vmatprep.mubr.f32.mxu0 0.0
    %433 = vmatmul.mubr.f32.gmra.mxu0 %v342
    %v434 = vpop.f32.mrf.mxu0
    %v435 = vadd.f32 %v362, %v434
    %v436 = vpop.f32.mrf.mxu0
    %437 = vdwg.mxu0
    %v438 = vtanh.pop %v430
    %v439 = vtanh.pop %v435
    %440 = vst [vmem:[#allocation8] sm:$0xff] %v438
    %441 = vst [vmem:[#allocation8 + $0x8] sm:$0xff] %v439
    // Predicated region
    $region26: #{tpu_custom_call.1} parent=1 // pred_check
      _
    $region27: #{tpu_custom_call.1} parent=1 // pred_check_branch
      %443 = sbr.rel (0) target = $region29
    $region28: #{tpu_custom_call.1} parent=1 // pred_region
      %s445 = ssub.s32 256, 256
      %446 = vsyncadd [#allocation4], %s445
      %s447 = sshll.u32 [#allocation8], 4
      %s448 = int_to_ptr.vmem [resolvable:$true] %s447
      %453 = dma.vmem_to_hbm [thread:$0]  %s448, 256, %s3, [#allocation4], 128, 128, 8
    $region29: #{tpu_custom_call.1} parent=1 // pred_fallthru
      _
    // Predicated region
    $region30: #{tpu_custom_call.1} parent=1 // pred_check
      _
    $region31: #{tpu_custom_call.1} parent=1 // pred_check_branch
      %455 = sbr.rel (0) target = $region33
    $region32: #{tpu_custom_call.1} parent=1 // pred_region
      %456 = dma.done [#allocation4], 256
    $region33: #{tpu_custom_call.1} parent=1 // pred_fallthru
      _
    %457 = vsyncpa [#allocation3], 1
    %458 = vsyncpa [#allocation6], 1
    %459 = vsyncpa [#allocation4], 1

</llo_original>
